<compile_context>
chip_gen: v7x
topology: tpu7x:2x2x1
jax: 0.10.0
libtpu: 0.0.40
codegen_flags: <defaults>
</compile_context>

<pallas_src>
import functools

import jax
import jax.numpy as jnp
from jax import lax
from jax.experimental import pallas as pl
from jax.experimental.pallas import tpu as pltpu


def _matmul_bias_relu_kernel(x_ref, w_ref, b_ref, o_ref):
    # x_ref: (block_m, K)        im2col patches (f32 or bf16)
    # w_ref: (K, Cout_pad)       BN-scale-folded weights (f32 or bf16)
    # b_ref: (1, Cout_pad)       BN-folded bias (f32)
    # o_ref: (block_m, Cout_pad) lane-dense output
    acc = jnp.dot(x_ref[...], w_ref[...], preferred_element_type=jnp.float32)
    y = jnp.maximum(acc + b_ref[...], 0.0)      # bias + ReLU in f32
    o_ref[...] = y.astype(o_ref.dtype)


def _round_up(x, m):
    return (x + m - 1) // m * m


@functools.partial(jax.jit, static_argnames=("eps", "block_m", "compute_dtype"))
def conv_bn_relu(x_nchw, weight_oihw, gamma, beta, running_mean, running_var,
                 eps=1e-5, block_m=256, compute_dtype=jnp.float32):
    """Fused Conv2d(3x3, stride=1, pad=1, bias=False) + BatchNorm2d(eval) + ReLU.

    x_nchw:      (N, Cin, H, W)      float32
    weight_oihw: (Cout, Cin, 3, 3)   float32
    gamma/beta/running_mean/running_var: (Cout,) float32
    returns:     (N, Cout, H, W)     same dtype as x_nchw
    """
    N, Cin, H, W = x_nchw.shape
    Cout = weight_oihw.shape[0]
    K = 9 * Cin

    # ---- Fold BatchNorm (eval mode) into the conv weight + a bias. ----
    scale = gamma / jnp.sqrt(running_var + eps)           # (Cout,)
    bias = beta - running_mean * scale                    # (Cout,)
    # (Cout, Cin, 3, 3) -> (3, 3, Cin, Cout) -> (9*Cin, Cout), scaled per Cout.
    w_hwio = jnp.transpose(weight_oihw * scale[:, None, None, None],
                           (2, 3, 1, 0))
    w_mat = w_hwio.reshape(K, Cout)

    # ---- Lane-dense output: pad Cout up to a multiple of 128. ----
    cout_pad = _round_up(Cout, 128)
    w_mat = jnp.pad(w_mat, ((0, 0), (0, cout_pad - Cout))).astype(compute_dtype)
    bias_row = jnp.pad(bias, (0, cout_pad - Cout)).reshape(1, cout_pad)
    bias_row = bias_row.astype(jnp.float32)

    # ---- im2col: NCHW -> NHWC, pad spatially by 1, fold the 3x3 taps into K.
    x_nhwc = jnp.transpose(x_nchw, (0, 2, 3, 1))
    x_sp = jnp.pad(x_nhwc, ((0, 0), (1, 1), (1, 1), (0, 0)))
    patches = jnp.concatenate(
        [x_sp[:, kh:kh + H, kw:kw + W, :]
         for kh in range(3) for kw in range(3)],
        axis=-1)                                          # (N, H, W, 9*Cin)
    M = N * H * W
    lhs = patches.reshape(M, K)

    # ---- Tile the merged N*H*W axis (pad M to a multiple of the tile). ----
    bm = _round_up(min(block_m, _round_up(M, 8)), 8)
    m_pad = _round_up(M, bm)
    lhs = jnp.pad(lhs, ((0, m_pad - M), (0, 0))).astype(compute_dtype)

    itemsize_in = jnp.dtype(compute_dtype).itemsize
    itemsize_out = jnp.dtype(x_nchw.dtype).itemsize
    cost = pl.CostEstimate(
        flops=2 * M * K * Cout,
        transcendentals=0,
        bytes_accessed=(m_pad * K * itemsize_in
                        + K * cout_pad * itemsize_in
                        + m_pad * cout_pad * itemsize_out))

    out = pl.pallas_call(
        _matmul_bias_relu_kernel,
        out_shape=jax.ShapeDtypeStruct((m_pad, cout_pad), x_nchw.dtype),
        grid_spec=pltpu.PrefetchScalarGridSpec(
            num_scalar_prefetch=0,
            grid=(m_pad // bm,),
            in_specs=[
                pl.BlockSpec((bm, K), lambda m: (m, 0)),
                pl.BlockSpec((K, cout_pad), lambda m: (0, 0)),
                pl.BlockSpec((1, cout_pad), lambda m: (0, 0)),
            ],
            out_specs=pl.BlockSpec((bm, cout_pad), lambda m: (m, 0)),
        ),
        compiler_params=pltpu.CompilerParams(
            dimension_semantics=("parallel",),
            vmem_limit_bytes=48 * 1024 * 1024),
        cost_estimate=cost,
    )(lhs, w_mat, bias_row)

    # Drop M / Cout padding BEFORE reshaping back, then NHWC -> NCHW.
    out = out[:M, :Cout].reshape(N, H, W, Cout)
    return jnp.transpose(out, (0, 3, 1, 2))


def _reference(x_nchw, weight_oihw, gamma, beta, running_mean, running_var,
               eps=1e-5):
    y = lax.conv_general_dilated(
        x_nchw, weight_oihw,
        window_strides=(1, 1), padding=((1, 1), (1, 1)),
        dimension_numbers=("NCHW", "OIHW", "NCHW"))
    scale = gamma / jnp.sqrt(running_var + eps)
    bias = beta - running_mean * scale
    y = y * scale[None, :, None, None] + bias[None, :, None, None]
    return jnp.maximum(y, 0.0)


if __name__ == "__main__":
    key = jax.random.PRNGKey(0)
    k1, k2, k3, k4, k5, k6 = jax.random.split(key, 6)

    N, Cin, Cout, H, W = 2, 4, 8, 16, 16

    x = jax.random.normal(k1, (N, Cin, H, W), dtype=jnp.float32)
    weight = 0.1 * jax.random.normal(k2, (Cout, Cin, 3, 3), dtype=jnp.float32)
    gamma = 1.0 + 0.1 * jax.random.normal(k3, (Cout,), dtype=jnp.float32)
    beta = 0.1 * jax.random.normal(k4, (Cout,), dtype=jnp.float32)
    running_mean = 0.1 * jax.random.normal(k5, (Cout,), dtype=jnp.float32)
    running_var = 1.0 + 0.1 * jnp.abs(
        jax.random.normal(k6, (Cout,), dtype=jnp.float32))

    ref = _reference(x, weight, gamma, beta, running_mean, running_var)

    # f32-operand path (tight tolerance).
    out = conv_bn_relu(x, weight, gamma, beta, running_mean, running_var)
    out = jax.block_until_ready(out)
    assert out.shape == (N, Cout, H, W)
    assert jnp.allclose(out, ref, atol=1e-4, rtol=1e-4), "f32 mismatch vs reference"

    # bf16-operand path (MXU-native on v5e/v6e/v7x, f32 accumulate) — looser tol.
    out_bf16 = conv_bn_relu(x, weight, gamma, beta, running_mean, running_var,
                            compute_dtype=jnp.bfloat16)
    out_bf16 = jax.block_until_ready(out_bf16)
    assert jnp.allclose(out_bf16, ref, atol=5e-2, rtol=5e-2), "bf16 mismatch vs reference"

    print("KERNEL_OK")
</pallas_src>

<mosaic_0001>
module attributes {stable_mosaic.version = 11 : i64} {
  func.func @_matmul_bias_relu_kernel(%arg0: i32, %arg1: memref<256x36xf32, #tpu.memory_space<vmem>>, %arg2: memref<36x128xf32, #tpu.memory_space<vmem>>, %arg3: memref<1x128xf32, #tpu.memory_space<vmem>>, %arg4: memref<256x128xf32, #tpu.memory_space<vmem>>) attributes {dimension_semantics = [#tpu.dimension_semantics<parallel>], iteration_bounds = array<i64: 2>, scalar_prefetch = 0 : i64, scratch_operands = 0 : i64, tpu.core_type = #tpu.core_type<tc>, window_params = [{transform_indices = @transform_0, window_bounds = array<i64: 256, 36>}, {pipeline_mode = #tpu.pipeline_mode<synchronous>, transform_indices = @transform_1, window_bounds = array<i64: 36, 128>}, {pipeline_mode = #tpu.pipeline_mode<synchronous>, transform_indices = @transform_2, window_bounds = array<i64: 1, 128>}, {transform_indices = @transform_3, window_bounds = array<i64: 256, 128>}]} {
    %c0 = arith.constant 0 : index
    %c0_0 = arith.constant 0 : index
    %0 = vector.load %arg1[%c0, %c0_0] : memref<256x36xf32, #tpu.memory_space<vmem>>, vector<256x36xf32>
    %c0_1 = arith.constant 0 : index
    %c0_2 = arith.constant 0 : index
    %1 = vector.load %arg2[%c0_1, %c0_2] : memref<36x128xf32, #tpu.memory_space<vmem>>, vector<36x128xf32>
    %cst = arith.constant dense<0.000000e+00> : vector<256x128xf32>
    %2 = tpu.matmul %0, %1, %cst {dimension_numbers = #tpu.dot_dimension_numbers<[1], [0], [0], [1], [0, 0, 1, 1], [], []>} : vector<256x36xf32>, vector<36x128xf32>, vector<256x128xf32> -> vector<256x128xf32>
    %c0_3 = arith.constant 0 : index
    %c0_4 = arith.constant 0 : index
    %3 = vector.load %arg3[%c0_3, %c0_4] : memref<1x128xf32, #tpu.memory_space<vmem>>, vector<1x128xf32>
    %4 = vector.broadcast %3 : vector<1x128xf32> to vector<256x128xf32>
    %5 = arith.addf %2, %4 : vector<256x128xf32>
    %cst_5 = arith.constant 0.000000e+00 : f32
    %6 = vector.broadcast %cst_5 : f32 to vector<256x128xf32>
    %7 = arith.maximumf %5, %6 : vector<256x128xf32>
    %c0_6 = arith.constant 0 : index
    %c0_7 = arith.constant 0 : index
    %8 = vector.load %arg4[%c0_6, %c0_7] : memref<256x128xf32, #tpu.memory_space<vmem>>, vector<256x128xf32>
    tpu.vector_store %arg4[%c0_6, %c0_7], %7 {strides = array<i32>} : memref<256x128xf32, #tpu.memory_space<vmem>>, vector<256x128xf32>,
    return
  }
  func.func @transform_0(%arg0: i32) -> (i32, i32) {
    %c0_i32 = arith.constant 0 : i32
    %c0_i32_0 = arith.constant 0 : i32
    return %arg0, %c0_i32 : i32, i32
  }
  func.func @transform_1(%arg0: i32) -> (i32, i32) {
    %c0_i32 = arith.constant 0 : i32
    %c0_i32_0 = arith.constant 0 : i32
    %c0_i32_1 = arith.constant 0 : i32
    return %c0_i32, %c0_i32_0 : i32, i32
  }
  func.func @transform_2(%arg0: i32) -> (i32, i32) {
    %c0_i32 = arith.constant 0 : i32
    %c0_i32_0 = arith.constant 0 : i32
    %c0_i32_1 = arith.constant 0 : i32
    return %c0_i32, %c0_i32_0 : i32, i32
  }
  func.func @transform_3(%arg0: i32) -> (i32, i32) {
    %c0_i32 = arith.constant 0 : i32
    %c0_i32_0 = arith.constant 0 : i32
    return %arg0, %c0_i32 : i32, i32
  }
}

</mosaic_0001>

<llo_original>
// kernel: conv_bn_relu.1
$region0: #{conv_bn_relu.1}
  #allocation0 [shape = 'u32[]', space=smem, size = 0x4, offset = 0x4, fixed_abs, tag = 'smem constant byte address 0x4 - core index']
  #allocation1 [shape = 'u32[144,128]{1,0:T(1,128)}', space=vmem, size = 0x12000, scoped, tag = 'internal scratch']
  %s0 = inlined_call_operand.vmem [shape: f32[512,36], index: 0, kind: input, shape index: {}]
  %s1 = inlined_call_operand.vmem [shape: f32[36,128], index: 1, kind: input, shape index: {}]
  %s2 = inlined_call_operand.vmem [shape: f32[1,128], index: 2, kind: input, shape index: {}]
  %s3 = inlined_call_operand.vmem [shape: f32[512,128], index: 3, kind: output, shape index: {}]
  %s4 = sld [smem:[#allocation0]]
  $region45: #{conv_bn_relu.1} parent=0
    _
  %s6 = ssub.s32 1, %s4
  %s7 = scalar_select 0, %s6, %s4
  loop: start=0, step=1, limit=4
  $region2: #{conv_bn_relu.1} parent=0 // loop_pre_header
    _
  $region3: #{conv_bn_relu.1} parent=0 // loop_header
    %s9 = sphi 0, %s13
    %p10 = scmp.ge.s32.totalorder %s9, 4
    %s19 = sphi 0, %s21
    %s22 = sphi 0, %s19
    %s23 = sphi 0, %s22
    %s39 = sphi 0, %s23
    %s43 = sphi 0, %s43
    %s45 = sphi 0, %s43
    %s46 = sphi 0, %s45
    %s60 = sphi 0, %s46
    %s64 = sphi 0, %s64
    %s66 = sphi 0, %s64
    %s67 = sphi 0, %s66
    %s81 = sphi 0, %s67
    %s87 = sphi 0, %s89
    %s90 = sphi 0, %s87
    %s91 = sphi 0, %s90
    %s107 = sphi 0, %s91
  $region4: #{conv_bn_relu.1} parent=0 // loop_header_branch
    %12 = sbr.rel (%p10) target = $region8
  $region5: #{conv_bn_relu.1} parent=0 // loop_body
    %s14 = ssub.s32 %s9, 1
    %s15 = ssub.s32 %s9, 2
    %s16 = sadd.s32 %s9, 1
    %s17 = ssub.s32 %s9, %s16
    %p18 = scmp.eq.s32.totalorder %s17, 0
    %s20 = sadd.s32 %s19, 1
    %s21 = scalar_select %p18, %s19, %s20
    %p24 = pneg %p18
    %p25 = scmp.eq.s32.totalorder %s9, 1
    %p26 = por %p24, %p25
    %p27 = scmp.ne.s32.totalorder %s19, %s22
    %p28 = scmp.eq.s32.totalorder %s9, 0
    %p29 = por %p27, %p28
    %p30 = scmp.ne.s32.totalorder %s19, %s22
    %p31 = scmp.eq.s32.totalorder %s14, 1
    %p32 = por %p30, %p31
    %p33 = scmp.ne.s32.totalorder %s22, %s23
    %p34 = scmp.eq.s32.totalorder %s14, 0
    %p35 = por %p33, %p34
    %p36 = scmp.ne.s32.totalorder %s22, %s23
    %p37 = scmp.eq.s32.totalorder %s15, 1
    %p38 = por %p36, %p37
    %p40 = scmp.ne.s32.totalorder %s23, %s39
    %p41 = scmp.eq.s32.totalorder %s15, 0
    %p42 = por %p40, %p41
    %s44 = sadd.s32 %s43, 1
    %p47 = scmp.eq.s32.totalorder %s9, 1
    %p48 = scmp.ne.s32.totalorder %s43, %s45
    %p49 = scmp.eq.s32.totalorder %s9, 0
    %p50 = por %p48, %p49
    %p51 = scmp.ne.s32.totalorder %s43, %s45
    %p52 = scmp.eq.s32.totalorder %s14, 1
    %p53 = por %p51, %p52
    %p54 = scmp.ne.s32.totalorder %s45, %s46
    %p55 = scmp.eq.s32.totalorder %s14, 0
    %p56 = por %p54, %p55
    %p57 = scmp.ne.s32.totalorder %s45, %s46
    %p58 = scmp.eq.s32.totalorder %s15, 1
    %p59 = por %p57, %p58
    %p61 = scmp.ne.s32.totalorder %s46, %s60
    %p62 = scmp.eq.s32.totalorder %s15, 0
    %p63 = por %p61, %p62
    %s65 = sadd.s32 %s64, 1
    %p68 = scmp.eq.s32.totalorder %s9, 1
    %p69 = scmp.ne.s32.totalorder %s64, %s66
    %p70 = scmp.eq.s32.totalorder %s9, 0
    %p71 = por %p69, %p70
    %p72 = scmp.ne.s32.totalorder %s64, %s66
    %p73 = scmp.eq.s32.totalorder %s14, 1
    %p74 = por %p72, %p73
    %p75 = scmp.ne.s32.totalorder %s66, %s67
    %p76 = scmp.eq.s32.totalorder %s14, 0
    %p77 = por %p75, %p76
    %p78 = scmp.ne.s32.totalorder %s66, %s67
    %p79 = scmp.eq.s32.totalorder %s15, 1
    %p80 = por %p78, %p79
    %p82 = scmp.ne.s32.totalorder %s67, %s81
    %p83 = scmp.eq.s32.totalorder %s15, 0
    %p84 = por %p82, %p83
    %s85 = ssub.s32 %s9, %s16
    %p86 = scmp.eq.s32.totalorder %s85, 0
    %s88 = sadd.s32 %s87, 1
    %s89 = scalar_select %p86, %s87, %s88
    %p92 = pneg %p86
    %p93 = scmp.eq.s32.totalorder %s9, 1
    %p94 = por %p92, %p93
    %p95 = scmp.ne.s32.totalorder %s87, %s90
    %p96 = scmp.eq.s32.totalorder %s9, 0
    %p97 = por %p95, %p96
    %p98 = scmp.ne.s32.totalorder %s87, %s90
    %p99 = scmp.eq.s32.totalorder %s14, 1
    %p100 = por %p98, %p99
    %p101 = scmp.ne.s32.totalorder %s90, %s91
    %p102 = scmp.eq.s32.totalorder %s14, 0
    %p103 = por %p101, %p102
    %p104 = scmp.ne.s32.totalorder %s90, %s91
    %p105 = scmp.eq.s32.totalorder %s15, 1
    %p106 = por %p104, %p105
    %p108 = scmp.ne.s32.totalorder %s91, %s107
    %p109 = scmp.eq.s32.totalorder %s15, 0
    %p110 = por %p108, %p109
    %p111 = scmp.le.s32.totalorder 1, %s9
    %p112 = scmp.lt.s32.totalorder %s9, 3
    %p113 = pnand %p111, %p112
    %p114 = pneg %p113
    // Predicated region
    $region9: #{conv_bn_relu.1} parent=5 // pred_check
      _
    $region10: #{conv_bn_relu.1} parent=5 // pred_check_branch
      %116 = sbr.rel (%p113) target = $region12
    $region11: #{conv_bn_relu.1} parent=5 // pred_region
      %s117 = ssub.s32 %s9, 1
      // Predicated region
      $region13: #{conv_bn_relu.1} parent=11 // pred_check
        %p118 = pneg %p56
      $region14: #{conv_bn_relu.1} parent=11 // pred_check_branch
        %120 = sbr.rel (%p118) target = $region16
      $region15: #{conv_bn_relu.1} parent=11 // pred_region
        _
      $region16: #{conv_bn_relu.1} parent=11 // pred_fallthru
        _
      // Predicated region
      $region17: #{conv_bn_relu.1} parent=11 // pred_check
        %p121 = pneg %p77
      $region18: #{conv_bn_relu.1} parent=11 // pred_check_branch
        %123 = sbr.rel (%p121) target = $region20
      $region19: #{conv_bn_relu.1} parent=11 // pred_region
        _
      $region20: #{conv_bn_relu.1} parent=11 // pred_fallthru
        _
    $region12: #{conv_bn_relu.1} parent=5 // pred_fallthru
      _
    %p124 = scmp.lt.s32.totalorder %s9, 2
    // Predicated region
    $region21: #{conv_bn_relu.1} parent=5 // pred_check
      %p125 = pneg %p124
    $region22: #{conv_bn_relu.1} parent=5 // pred_check_branch
      %127 = sbr.rel (%p125) target = $region24
    $region23: #{conv_bn_relu.1} parent=5 // pred_region
      // Predicated region
      $region25: #{conv_bn_relu.1} parent=23 // pred_check
        %p128 = pneg %p29
      $region26: #{conv_bn_relu.1} parent=23 // pred_check_branch
        %130 = sbr.rel (%p128) target = $region28
      $region27: #{conv_bn_relu.1} parent=23 // pred_region
        %s131 = smul.u32 32, %s9
        %p132 = scmp.lt.s32.totalorder %s131, 63
        %s133 = scalar_select %p132, %s131, 63
        %s134 = smul.addr %s133, 8
        %s135 = scalar_lea.vmem %s0, %s134
        %s136 = smul.u32 32, %s9
      $region28: #{conv_bn_relu.1} parent=23 // pred_fallthru
        _
    $region24: #{conv_bn_relu.1} parent=5 // pred_fallthru
      _
    %p137 = scmp.le.s32.totalorder 1, %s9
    %p138 = scmp.lt.s32.totalorder %s9, 3
    %p139 = pnand %p137, %p138
    %p140 = pneg %p139
    // Predicated region
    $region29: #{conv_bn_relu.1} parent=5 // pred_check
      _
    $region30: #{conv_bn_relu.1} parent=5 // pred_check_branch
      %142 = sbr.rel (%p139) target = $region32
    $region31: #{conv_bn_relu.1} parent=5 // pred_region
      %s143 = ssub.s32 %s9, 1
      %s144 = smul.u32 32, %s14
      %p145 = scmp.lt.s32.totalorder %s144, 63
      %s146 = scalar_select %p145, %s144, 63
      %s147 = smul.addr %s146, 8
      %s148 = scalar_lea.vmem %s0, %s147
      %p149 = pneg %p35
      %p150 = pneg %p32
      %p151 = pneg %p56
      %p152 = pneg %p53
      %p153 = pneg %p77
      %p154 = pneg %p74
      %p155 = pneg %p103
      %p156 = pneg %p100
      %s157 = smul.u32 32, %s14
      %p158 = scmp.lt.s32.totalorder %s157, 63
      %s159 = scalar_select %p158, %s157, 63
      %s160 = smul.addr %s159, 8
      %s161 = scalar_lea.vmem %s3, %s160
      %s162 = smul.u32 32, %s14
      %p163 = scmp.lt.s32.totalorder %s162, 63
      %s164 = scalar_select %p163, %s162, 63
      %s165 = smul.addr %s164, 8
      %s166 = scalar_lea.vmem %s0, %s165
      %s167 = smul.u32 32, %s14
      %s168 = smul.u32 32, %s14
      %p169 = scmp.lt.s32.totalorder %s168, 63
      %s170 = scalar_select %p169, %s168, 63
      %s171 = smul.addr %s170, 8
      %s172 = scalar_lea.vmem %s3, %s171
      %s173 = smul.u32 32, %s14
      %v174 = vld [vmem:[%s166] sm:$0xff]
      %v175 = vld [vmem:[%s166 + $0x8] sm:$0xff]
      %v176 = vld [vmem:[%s166 + $0x10] sm:$0xff]
      %v177 = vld [vmem:[%s166 + $0x18] sm:$0xff]
      %v178 = vld [vmem:[%s166 + $0x20] sm:$0xff]
      %v179 = vld [vmem:[%s166 + $0x28] sm:$0xff]
      %v180 = vld [vmem:[%s166 + $0x30] sm:$0xff]
      %v181 = vld [vmem:[%s166 + $0x38] sm:$0xff]
      %v182 = vld [vmem:[%s166 + $0x40] sm:$0xff]
      %v183 = vld [vmem:[%s166 + $0x48] sm:$0xff]
      %v184 = vld [vmem:[%s166 + $0x50] sm:$0xff]
      %v185 = vld [vmem:[%s166 + $0x58] sm:$0xff]
      %v186 = vld [vmem:[%s166 + $0x60] sm:$0xff]
      %v187 = vld [vmem:[%s166 + $0x68] sm:$0xff]
      %v188 = vld [vmem:[%s166 + $0x70] sm:$0xff]
      %v189 = vld [vmem:[%s166 + $0x78] sm:$0xff]
      %v190 = vld [vmem:[%s166 + $0x80] sm:$0xff]
      %v191 = vld [vmem:[%s166 + $0x88] sm:$0xff]
      %v192 = vld [vmem:[%s166 + $0x90] sm:$0xff]
      %v193 = vld [vmem:[%s166 + $0x98] sm:$0xff]
      %v194 = vld [vmem:[%s166 + $0xa0] sm:$0xff]
      %v195 = vld [vmem:[%s166 + $0xa8] sm:$0xff]
      %v196 = vld [vmem:[%s166 + $0xb0] sm:$0xff]
      %v197 = vld [vmem:[%s166 + $0xb8] sm:$0xff]
      %v198 = vld [vmem:[%s166 + $0xc0] sm:$0xff]
      %v199 = vld [vmem:[%s166 + $0xc8] sm:$0xff]
      %v200 = vld [vmem:[%s166 + $0xd0] sm:$0xff]
      %v201 = vld [vmem:[%s166 + $0xd8] sm:$0xff]
      %v202 = vld [vmem:[%s166 + $0xe0] sm:$0xff]
      %v203 = vld [vmem:[%s166 + $0xe8] sm:$0xff]
      %v204 = vld [vmem:[%s166 + $0xf0] sm:$0xff]
      %v205 = vld [vmem:[%s166 + $0xf8] sm:$0xff]
      %v206 = vld [vmem:[%s1] sm:$0xff]
      %v207 = vld [vmem:[%s1 + $0x8] sm:$0xff]
      %v208 = vld [vmem:[%s1 + $0x10] sm:$0xff]
      %v209 = vld [vmem:[%s1 + $0x18] sm:$0xff]
      %v210 = vld [vmem:[%s1 + $0x20] sm:$0xf]
      %v211 = vld [vmem:[%s2] sm:$0x1]
      %v213 = vlaneseq
      %v214 = vshrl.u32 %v213, 7
      %v215 = vsub.s32 0, %v214
      %v216 = vrot.slane %v211, %v215
      %vm218 = vcmask 293888
      %v220 = vsel %vm218, %v174, 0
      %v223 = vsel %vm218, %v175, 0
      %v226 = vsel %vm218, %v176, 0
      %v229 = vsel %vm218, %v177, 0
      %v232 = vsel %vm218, %v178, 0
      %v235 = vsel %vm218, %v179, 0
      %v238 = vsel %vm218, %v180, 0
      %v241 = vsel %vm218, %v181, 0
      %v244 = vsel %vm218, %v182, 0
      %v247 = vsel %vm218, %v183, 0
      %v250 = vsel %vm218, %v184, 0
      %v253 = vsel %vm218, %v185, 0
      %v256 = vsel %vm218, %v186, 0
      %v259 = vsel %vm218, %v187, 0
      %v262 = vsel %vm218, %v188, 0
      %v265 = vsel %vm218, %v189, 0
      %v268 = vsel %vm218, %v190, 0
      %v271 = vsel %vm218, %v191, 0
      %v274 = vsel %vm218, %v192, 0
      %v277 = vsel %vm218, %v193, 0
      %v280 = vsel %vm218, %v194, 0
      %v283 = vsel %vm218, %v195, 0
      %v286 = vsel %vm218, %v196, 0
      %v289 = vsel %vm218, %v197, 0
      %v292 = vsel %vm218, %v198, 0
      %v295 = vsel %vm218, %v199, 0
      %v298 = vsel %vm218, %v200, 0
      %v301 = vsel %vm218, %v201, 0
      %v304 = vsel %vm218, %v202, 0
      %v307 = vsel %vm218, %v203, 0
      %v310 = vsel %vm218, %v204, 0
      %v313 = vsel %vm218, %v205, 0
      %vm315 = vcmask 1043456
      %v317 = vsel %vm315, %v210, 0
      %319 = vmatprep.subr.mxu0 0.0
      %320 = vmatpush1.msra.mxu0 %v206
      %321 = vmatprep.subr.mxu0 0.0
      %322 = vmatpush1.msra.mxu0 %v207
      %323 = vmatprep.subr.mxu0 0.0
      %324 = vmatpush1.msra.mxu0 %v208
      %325 = vmatprep.subr.mxu0 0.0
      %326 = vmatpush1.msra.mxu0 %v209
      %327 = vmatprep.subr.mxu0 0.0
      %328 = vmatpush1.msra.mxu0 %v317
      %329 = vmatprep.subr.mxu0 0.0
      %330 = vmatpush1.msra.mxu0 0.0
      %331 = vmatprep.subr.mxu0 0.0
      %332 = vmatpush1.msra.mxu0 0.0
      %333 = vmatprep.subr.mxu0 0.0
      %334 = vmatpush1.msra.mxu0 0.0
      %335 = vmatprep.subr.mxu0 0.0
      %336 = vmatpush1.msra.mxu0 0.0
      %337 = vmatprep.subr.mxu0 0.0
      %338 = vmatpush1.msra.mxu0 0.0
      %339 = vmatprep.subr.mxu0 0.0
      %340 = vmatpush1.msra.mxu0 0.0
      %341 = vmatprep.subr.mxu0 0.0
      %342 = vmatpush1.msra.mxu0 0.0
      %343 = vmatprep.subr.mxu0 0.0
      %344 = vmatpush1.msra.mxu0 0.0
      %345 = vmatprep.subr.mxu0 0.0
      %346 = vmatpush1.msra.mxu0 0.0
      %347 = vmatprep.subr.mxu0 0.0
      %348 = vmatpush1.msra.mxu0 0.0
      %349 = vmatprep.subr.mxu0 0.0
      %350 = vmatpush1.msra.mxu0 0.0
      %351 = vmatprep.subr.mxu0 0.0
      %352 = vmatpush1.msra.mxu0 0.0
      %353 = vmatprep.subr.mxu0 0.0
      %354 = vmatpush1.msra.mxu0 0.0
      %355 = vmatprep.subr.mxu0 0.0
      %356 = vmatpush1.msra.mxu0 0.0
      %357 = vmatprep.subr.mxu0 0.0
      %358 = vmatpush1.msra.mxu0 0.0
      %359 = vmatprep.subr.mxu0 0.0
      %360 = vmatpush1.msra.mxu0 0.0
      %361 = vmatprep.subr.mxu0 0.0
      %362 = vmatpush1.msra.mxu0 0.0
      %363 = vmatprep.subr.mxu0 0.0
      %364 = vmatpush1.msra.mxu0 0.0
      %365 = vmatprep.subr.mxu0 0.0
      %366 = vmatpush1.msra.mxu0 0.0
      %367 = vmatprep.subr.mxu0 0.0
      %368 = vmatpush1.msra.mxu0 0.0
      %369 = vmatprep.subr.mxu0 0.0
      %370 = vmatpush1.msra.mxu0 0.0
      %371 = vmatprep.subr.mxu0 0.0
      %372 = vmatpush1.msra.mxu0 0.0
      %373 = vmatprep.subr.mxu0 0.0
      %374 = vmatpush1.msra.mxu0 0.0
      %375 = vmatprep.subr.mxu0 0.0
      %376 = vmatpush1.msra.mxu0 0.0
      %377 = vmatprep.subr.mxu0 0.0
      %378 = vmatpush1.msra.mxu0 0.0
      %379 = vmatprep.subr.mxu0 0.0
      %380 = vmatpush1.msra.mxu0 0.0
      %381 = vmatprep.subr.mxu0 0.0
      %382 = vmatpush1.msra.mxu0 0.0
      %383 = vmatprep.mubr.f32.mxu0 0.0
      %384 = vmatmul.mubr.f32.gmra.mrb[0].mxu0 %v220
      %v385 = vpop.f32.mrb[0].mxu0
      %v386 = vadd.f32 %v216, %v385
      %v387 = vpop.f32.mrb[0].mxu0
      %388 = vmatprep.mubr.f32.mxu0 0.0
      %389 = vmatmul.mubr.f32.gmra.mrb[0].mxu0 %v223
      %v390 = vpop.f32.mrb[0].mxu0
      %v391 = vadd.f32 %v216, %v390
      %v392 = vpop.f32.mrb[0].mxu0
      %393 = vmatprep.mubr.f32.mxu0 0.0
      %394 = vmatmul.mubr.f32.gmra.mrb[0].mxu0 %v226
      %v395 = vpop.f32.mrb[0].mxu0
      %v396 = vadd.f32 %v216, %v395
      %v397 = vpop.f32.mrb[0].mxu0
      %398 = vmatprep.mubr.f32.mxu0 0.0
      %399 = vmatmul.mubr.f32.gmra.mrb[0].mxu0 %v229
      %v400 = vpop.f32.mrb[0].mxu0
      %v401 = vadd.f32 %v216, %v400
      %v402 = vpop.f32.mrb[0].mxu0
      %403 = vmatprep.mubr.f32.mxu0 0.0
      %404 = vmatmul.mubr.f32.gmra.mrb[0].mxu0 %v232
      %v405 = vpop.f32.mrb[0].mxu0
      %v406 = vadd.f32 %v216, %v405
      %v407 = vpop.f32.mrb[0].mxu0
      %408 = vmatprep.mubr.f32.mxu0 0.0
      %409 = vmatmul.mubr.f32.gmra.mrb[0].mxu0 %v235
      %v410 = vpop.f32.mrb[0].mxu0
      %v411 = vadd.f32 %v216, %v410
      %v412 = vpop.f32.mrb[0].mxu0
      %413 = vmatprep.mubr.f32.mxu0 0.0
      %414 = vmatmul.mubr.f32.gmra.mrb[0].mxu0 %v238
      %v415 = vpop.f32.mrb[0].mxu0
      %v416 = vadd.f32 %v216, %v415
      %v417 = vpop.f32.mrb[0].mxu0
      %418 = vmatprep.mubr.f32.mxu0 0.0
      %419 = vmatmul.mubr.f32.gmra.mrb[0].mxu0 %v241
      %v420 = vpop.f32.mrb[0].mxu0
      %v421 = vadd.f32 %v216, %v420
      %v422 = vpop.f32.mrb[0].mxu0
      %423 = vmatprep.mubr.f32.mxu0 0.0
      %424 = vmatmul.mubr.f32.gmra.mrb[0].mxu0 %v244
      %v425 = vpop.f32.mrb[0].mxu0
      %v426 = vadd.f32 %v216, %v425
      %v427 = vpop.f32.mrb[0].mxu0
      %428 = vmatprep.mubr.f32.mxu0 0.0
      %429 = vmatmul.mubr.f32.gmra.mrb[0].mxu0 %v247
      %v430 = vpop.f32.mrb[0].mxu0
      %v431 = vadd.f32 %v216, %v430
      %v432 = vpop.f32.mrb[0].mxu0
      %433 = vmatprep.mubr.f32.mxu0 0.0
      %434 = vmatmul.mubr.f32.gmra.mrb[0].mxu0 %v250
      %v435 = vpop.f32.mrb[0].mxu0
      %v436 = vadd.f32 %v216, %v435
      %v437 = vpop.f32.mrb[0].mxu0
      %438 = vmatprep.mubr.f32.mxu0 0.0
      %439 = vmatmul.mubr.f32.gmra.mrb[0].mxu0 %v253
      %v440 = vpop.f32.mrb[0].mxu0
      %v441 = vadd.f32 %v216, %v440
      %v442 = vpop.f32.mrb[0].mxu0
      %443 = vmatprep.mubr.f32.mxu0 0.0
      %444 = vmatmul.mubr.f32.gmra.mrb[0].mxu0 %v256
      %v445 = vpop.f32.mrb[0].mxu0
      %v446 = vadd.f32 %v216, %v445
      %v447 = vpop.f32.mrb[0].mxu0
      %448 = vmatprep.mubr.f32.mxu0 0.0
      %449 = vmatmul.mubr.f32.gmra.mrb[0].mxu0 %v259
      %v450 = vpop.f32.mrb[0].mxu0
      %v451 = vadd.f32 %v216, %v450
      %v452 = vpop.f32.mrb[0].mxu0
      %453 = vmatprep.mubr.f32.mxu0 0.0
      %454 = vmatmul.mubr.f32.gmra.mrb[0].mxu0 %v262
      %v455 = vpop.f32.mrb[0].mxu0
      %v456 = vadd.f32 %v216, %v455
      %v457 = vpop.f32.mrb[0].mxu0
      %458 = vmatprep.mubr.f32.mxu0 0.0
      %459 = vmatmul.mubr.f32.gmra.mrb[0].mxu0 %v265
      %v460 = vpop.f32.mrb[0].mxu0
      %v461 = vadd.f32 %v216, %v460
      %v462 = vpop.f32.mrb[0].mxu0
      %463 = vmatprep.mubr.f32.mxu0 0.0
      %464 = vmatmul.mubr.f32.gmra.mrb[0].mxu0 %v268
      %v465 = vpop.f32.mrb[0].mxu0
      %v466 = vadd.f32 %v216, %v465
      %v467 = vpop.f32.mrb[0].mxu0
      %468 = vmatprep.mubr.f32.mxu0 0.0
      %469 = vmatmul.mubr.f32.gmra.mrb[0].mxu0 %v271
      %v470 = vpop.f32.mrb[0].mxu0
      %v471 = vadd.f32 %v216, %v470
      %v472 = vpop.f32.mrb[0].mxu0
      %473 = vmatprep.mubr.f32.mxu0 0.0
      %474 = vmatmul.mubr.f32.gmra.mrb[0].mxu0 %v274
      %v475 = vpop.f32.mrb[0].mxu0
      %v476 = vadd.f32 %v216, %v475
      %v477 = vpop.f32.mrb[0].mxu0
      %478 = vmatprep.mubr.f32.mxu0 0.0
      %479 = vmatmul.mubr.f32.gmra.mrb[0].mxu0 %v277
      %v480 = vpop.f32.mrb[0].mxu0
      %v481 = vadd.f32 %v216, %v480
      %v482 = vpop.f32.mrb[0].mxu0
      %483 = vmatprep.mubr.f32.mxu0 0.0
      %484 = vmatmul.mubr.f32.gmra.mrb[0].mxu0 %v280
      %v485 = vpop.f32.mrb[0].mxu0
      %v486 = vadd.f32 %v216, %v485
      %v487 = vpop.f32.mrb[0].mxu0
      %488 = vmatprep.mubr.f32.mxu0 0.0
      %489 = vmatmul.mubr.f32.gmra.mrb[0].mxu0 %v283
      %v490 = vpop.f32.mrb[0].mxu0
      %v491 = vadd.f32 %v216, %v490
      %v492 = vpop.f32.mrb[0].mxu0
      %493 = vmatprep.mubr.f32.mxu0 0.0
      %494 = vmatmul.mubr.f32.gmra.mrb[0].mxu0 %v286
      %v495 = vpop.f32.mrb[0].mxu0
      %v496 = vadd.f32 %v216, %v495
      %v497 = vpop.f32.mrb[0].mxu0
      %498 = vmatprep.mubr.f32.mxu0 0.0
      %499 = vmatmul.mubr.f32.gmra.mrb[0].mxu0 %v289
      %v500 = vpop.f32.mrb[0].mxu0
      %v501 = vadd.f32 %v216, %v500
      %v502 = vpop.f32.mrb[0].mxu0
      %503 = vmatprep.mubr.f32.mxu0 0.0
      %504 = vmatmul.mubr.f32.gmra.mrb[0].mxu0 %v292
      %v505 = vpop.f32.mrb[0].mxu0
      %v506 = vadd.f32 %v216, %v505
      %v507 = vpop.f32.mrb[0].mxu0
      %508 = vmatprep.mubr.f32.mxu0 0.0
      %509 = vmatmul.mubr.f32.gmra.mrb[0].mxu0 %v295
      %v510 = vpop.f32.mrb[0].mxu0
      %v511 = vadd.f32 %v216, %v510
      %v512 = vpop.f32.mrb[0].mxu0
      %513 = vmatprep.mubr.f32.mxu0 0.0
      %514 = vmatmul.mubr.f32.gmra.mrb[0].mxu0 %v298
      %v515 = vpop.f32.mrb[0].mxu0
      %v516 = vadd.f32 %v216, %v515
      %v517 = vpop.f32.mrb[0].mxu0
      %518 = vmatprep.mubr.f32.mxu0 0.0
      %519 = vmatmul.mubr.f32.gmra.mrb[0].mxu0 %v301
      %v520 = vpop.f32.mrb[0].mxu0
      %v521 = vadd.f32 %v216, %v520
      %v522 = vpop.f32.mrb[0].mxu0
      %523 = vmatprep.mubr.f32.mxu0 0.0
      %524 = vmatmul.mubr.f32.gmra.mrb[0].mxu0 %v304
      %v525 = vpop.f32.mrb[0].mxu0
      %v526 = vadd.f32 %v216, %v525
      %v527 = vpop.f32.mrb[0].mxu0
      %528 = vmatprep.mubr.f32.mxu0 0.0
      %529 = vmatmul.mubr.f32.gmra.mrb[0].mxu0 %v307
      %v530 = vpop.f32.mrb[0].mxu0
      %v531 = vadd.f32 %v216, %v530
      %v532 = vpop.f32.mrb[0].mxu0
      %533 = vmatprep.mubr.f32.mxu0 0.0
      %534 = vmatmul.mubr.f32.gmra.mrb[0].mxu0 %v310
      %v535 = vpop.f32.mrb[0].mxu0
      %v536 = vadd.f32 %v216, %v535
      %v537 = vpop.f32.mrb[0].mxu0
      %538 = vmatprep.mubr.f32.mxu0 0.0
      %539 = vmatmul.mubr.f32.gmra.mrb[0].mxu0 %v313
      %v540 = vpop.f32.mrb[0].mxu0
      %v541 = vadd.f32 %v216, %v540
      %v542 = vpop.f32.mrb[0].mxu0
      %543 = vdwg.mxu0
      %v544 = vmax.f32 %v386, 0.0
      %v545 = vmax.f32 %v391, 0.0
      %v546 = vmax.f32 %v396, 0.0
      %v547 = vmax.f32 %v401, 0.0
      %v548 = vmax.f32 %v406, 0.0
      %v549 = vmax.f32 %v411, 0.0
      %v550 = vmax.f32 %v416, 0.0
      %v551 = vmax.f32 %v421, 0.0
      %v552 = vmax.f32 %v426, 0.0
      %v553 = vmax.f32 %v431, 0.0
      %v554 = vmax.f32 %v436, 0.0
      %v555 = vmax.f32 %v441, 0.0
      %v556 = vmax.f32 %v446, 0.0
      %v557 = vmax.f32 %v451, 0.0
      %v558 = vmax.f32 %v456, 0.0
      %v559 = vmax.f32 %v461, 0.0
      %v560 = vmax.f32 %v466, 0.0
      %v561 = vmax.f32 %v471, 0.0
      %v562 = vmax.f32 %v476, 0.0
      %v563 = vmax.f32 %v481, 0.0
      %v564 = vmax.f32 %v486, 0.0
      %v565 = vmax.f32 %v491, 0.0
      %v566 = vmax.f32 %v496, 0.0
      %v567 = vmax.f32 %v501, 0.0
      %v568 = vmax.f32 %v506, 0.0
      %v569 = vmax.f32 %v511, 0.0
      %v570 = vmax.f32 %v516, 0.0
      %v571 = vmax.f32 %v521, 0.0
      %v572 = vmax.f32 %v526, 0.0
      %v573 = vmax.f32 %v531, 0.0
      %v574 = vmax.f32 %v536, 0.0
      %v575 = vmax.f32 %v541, 0.0
      %576 = vst [vmem:[%s172] sm:$0xff] %v544
      %577 = vst [vmem:[%s172 + $0x8] sm:$0xff] %v545
      %578 = vst [vmem:[%s172 + $0x10] sm:$0xff] %v546
      %579 = vst [vmem:[%s172 + $0x18] sm:$0xff] %v547
      %580 = vst [vmem:[%s172 + $0x20] sm:$0xff] %v548
      %581 = vst [vmem:[%s172 + $0x28] sm:$0xff] %v549
      %582 = vst [vmem:[%s172 + $0x30] sm:$0xff] %v550
      %583 = vst [vmem:[%s172 + $0x38] sm:$0xff] %v551
      %584 = vst [vmem:[%s172 + $0x40] sm:$0xff] %v552
      %585 = vst [vmem:[%s172 + $0x48] sm:$0xff] %v553
      %586 = vst [vmem:[%s172 + $0x50] sm:$0xff] %v554
      %587 = vst [vmem:[%s172 + $0x58] sm:$0xff] %v555
      %588 = vst [vmem:[%s172 + $0x60] sm:$0xff] %v556
      %589 = vst [vmem:[%s172 + $0x68] sm:$0xff] %v557
      %590 = vst [vmem:[%s172 + $0x70] sm:$0xff] %v558
      %591 = vst [vmem:[%s172 + $0x78] sm:$0xff] %v559
      %592 = vst [vmem:[%s172 + $0x80] sm:$0xff] %v560
      %593 = vst [vmem:[%s172 + $0x88] sm:$0xff] %v561
      %594 = vst [vmem:[%s172 + $0x90] sm:$0xff] %v562
      %595 = vst [vmem:[%s172 + $0x98] sm:$0xff] %v563
      %596 = vst [vmem:[%s172 + $0xa0] sm:$0xff] %v564
      %597 = vst [vmem:[%s172 + $0xa8] sm:$0xff] %v565
      %598 = vst [vmem:[%s172 + $0xb0] sm:$0xff] %v566
      %599 = vst [vmem:[%s172 + $0xb8] sm:$0xff] %v567
      %600 = vst [vmem:[%s172 + $0xc0] sm:$0xff] %v568
      %601 = vst [vmem:[%s172 + $0xc8] sm:$0xff] %v569
      %602 = vst [vmem:[%s172 + $0xd0] sm:$0xff] %v570
      %603 = vst [vmem:[%s172 + $0xd8] sm:$0xff] %v571
      %604 = vst [vmem:[%s172 + $0xe0] sm:$0xff] %v572
      %605 = vst [vmem:[%s172 + $0xe8] sm:$0xff] %v573
      %606 = vst [vmem:[%s172 + $0xf0] sm:$0xff] %v574
      %607 = vst [vmem:[%s172 + $0xf8] sm:$0xff] %v575
      %s608 = smul.u32 32, %s14
      %p609 = scmp.lt.s32.totalorder %s608, 63
      %s610 = scalar_select %p609, %s608, 63
      %s611 = smul.addr %s610, 8
      %s612 = scalar_lea.vmem %s3, %s611
      // Predicated region
      $region33: #{conv_bn_relu.1} parent=31 // pred_check
        %p613 = pneg %p100
      $region34: #{conv_bn_relu.1} parent=31 // pred_check_branch
        %615 = sbr.rel (%p613) target = $region36
      $region35: #{conv_bn_relu.1} parent=31 // pred_region
        %s616 = smul.u32 32, %s14
      $region36: #{conv_bn_relu.1} parent=31 // pred_fallthru
        _
    $region32: #{conv_bn_relu.1} parent=5 // pred_fallthru
      _
    %p617 = scmp.le.s32.totalorder 2, %s9
    // Predicated region
    $region37: #{conv_bn_relu.1} parent=5 // pred_check
      %p618 = pneg %p617
    $region38: #{conv_bn_relu.1} parent=5 // pred_check_branch
      %620 = sbr.rel (%p618) target = $region40
    $region39: #{conv_bn_relu.1} parent=5 // pred_region
      %s621 = ssub.s32 %s9, 2
      // Predicated region
      $region41: #{conv_bn_relu.1} parent=39 // pred_check
        %p622 = pneg %p106
      $region42: #{conv_bn_relu.1} parent=39 // pred_check_branch
        %624 = sbr.rel (%p622) target = $region44
      $region43: #{conv_bn_relu.1} parent=39 // pred_region
        %s625 = smul.u32 32, %s15
        %p626 = scmp.lt.s32.totalorder %s625, 63
        %s627 = scalar_select %p626, %s625, 63
        %s628 = smul.addr %s627, 8
        %s629 = scalar_lea.vmem %s3, %s628
      $region44: #{conv_bn_relu.1} parent=39 // pred_fallthru
        _
    $region40: #{conv_bn_relu.1} parent=5 // pred_fallthru
      _
  $region6: #{conv_bn_relu.1} parent=0 // loop_footer
    %s13 = sadd.s32 1, %s9
  $region7: #{conv_bn_relu.1} parent=0 // loop_footer_branch
    %8 = sbr.rel target = $region3
  $region8: #{conv_bn_relu.1} parent=0 // loop_exit
    _

</llo_original>
